<compile_context>
chip_gen: v7x
topology: tpu7x:2x2x1
jax: 0.10.0
libtpu: 0.0.40
codegen_flags: <defaults>
</compile_context>

<pallas_src>
import functools

import jax
import jax.numpy as jnp
from jax.experimental import pallas as pl
from jax.experimental.pallas import tpu as pltpu


def _round_up(n, m):
    return ((n + m - 1) // m) * m


def _cdiv(a, b):
    return -(-a // b)


def _vmem_capacity_bytes():
    """Physical VMEM per core; conservative 64 MiB (v7x per-TC) fallback."""
    try:
        info = pltpu.get_tpu_info()
        for attr in ("vmem_capacity_bytes", "vmem_size_bytes", "vmem_bytes"):
            v = getattr(info, attr, None)
            if v:
                return int(v)
    except Exception:
        pass
    return 64 * 1024 * 1024


def _expert_linear_kernel(x_ref, w1_ref, b1_ref, g_ref, beta_ref,
                          w2_ref, b2_ref, out_ref, pooled_acc,
                          *, inv_s, rem, full_tile):
    """Grid = (batch_tiles, seq_tiles); seq is the trailing reduction axis."""
    s_idx = pl.program_id(1)
    n_s = pl.num_programs(1)

    # ---- init the pooled-sum accumulator at the first sequence chunk ----
    @pl.when(s_idx == 0)
    def _():
        pooled_acc[...] = jnp.zeros_like(pooled_acc)

    # ---- accumulate partial sum over this sequence chunk ----
    # TODO(synk): if a v7x bundle dump shows vadd (VALU) saturation here, fold
    # this reduce into an MXU ones-vector matvec instead of the sublane sum.
    x = x_ref[...].astype(jnp.float32)                    # (tb, ts, Din)
    if full_tile:
        pooled_acc[...] += jnp.sum(x, axis=1)
    else:
        @pl.when(s_idx < n_s - 1)
        def _():
            pooled_acc[...] += jnp.sum(x, axis=1)

        @pl.when(s_idx == n_s - 1)
        def _():
            # Mask the out-of-range rows of the ragged last sequence tile
            # (their contents are unspecified / possibly garbage).
            sidx = jax.lax.broadcasted_iota(jnp.int32, x.shape, 1)
            xm = jnp.where(sidx < rem, x, 0.0)
            pooled_acc[...] += jnp.sum(xm, axis=1)

    # ---- at the last sequence chunk: finish mean-pool and run the MLP ----
    @pl.when(s_idx == n_s - 1)
    def _():
        pooled = pooled_acc[...] * jnp.float32(inv_s)     # mean over true S

        # Linear(Din, 2H): bf16 operands, f32 accumulation on the MXU.
        y1 = jnp.dot(pooled.astype(w1_ref.dtype), w1_ref[...],
                     preferred_element_type=jnp.float32) + b1_ref[...]

        # LayerNorm(2H), eps = 1e-5, affine — fused single-pass statistics.
        mu = jnp.mean(y1, axis=-1, keepdims=True)
        ms = jnp.mean(y1 * y1, axis=-1, keepdims=True)
        var = jnp.maximum(ms - mu * mu, 0.0)
        yn = (y1 - mu) * jax.lax.rsqrt(var + jnp.float32(1e-5))
        yn = yn * g_ref[...] + beta_ref[...]

        # GELU (exact, erf-based — matches torch.nn.GELU default).
        act = 0.5 * yn * (1.0 + jax.lax.erf(yn * jnp.float32(0.7071067811865476)))

        # Linear(2H, H); H padded to a lane-dense multiple of 128.
        out = jnp.dot(act.astype(w2_ref.dtype), w2_ref[...],
                      preferred_element_type=jnp.float32) + b2_ref[...]
        out_ref[...] = out.astype(out_ref.dtype)


def expert_linear(x, w1, b1, gamma, beta, w2, b2, *,
                  tb=None, ts=None, vmem_limit_bytes=None):
    """x: (B, S, Din), ideally bf16 (encoder activations); returns (B, H) f32."""
    B, S, Din = x.shape
    h2 = w1.shape[1]
    H = w2.shape[1]
    Hp = _round_up(H, 128)                 # lane-dense output width (unmasked vst)

    # bf16 weights: native MXU operand on all generations, half the resident
    # VMEM.  Biases / LN params stay f32 (tiny; added post-accumulation).
    w1 = w1.astype(jnp.bfloat16)
    w2 = jnp.pad(w2, ((0, 0), (0, Hp - H))).astype(jnp.bfloat16)
    b1 = b1.astype(jnp.float32)
    gamma = gamma.astype(jnp.float32)
    beta = beta.astype(jnp.float32)
    b2 = jnp.pad(b2, ((0, 0), (0, Hp - H))).astype(jnp.float32)

    x_item = jnp.dtype(x.dtype).itemsize   # 2 if bf16 activations, 4 if f32
    w_item = 2

    # ---- batch tile -------------------------------------------------------
    if tb is None:
        tb = 128
    if B <= tb:
        tb = B                             # single (or full-dim) batch block
    else:
        tb = _round_up(tb, 8)
    # v7x: force >= 2 batch tiles so the "parallel" axis spans both TCs.
    if B >= 16 and _cdiv(B, tb) < 2:
        tb = max(8, _round_up(_cdiv(B, 2), 8))

    # ---- VMEM budget & sequence tile --------------------------------------
    phys = _vmem_capacity_bytes()
    headroom = 12 * 1024 * 1024            # compiler internal scratch etc.
    budget = max(phys - headroom, 8 * 1024 * 1024)

    const_bytes = (Din * h2 + h2 * Hp) * w_item + (3 * h2 + Hp) * 4
    fixed_bytes = const_bytes + 2 * tb * Hp * 4 + tb * Din * 4

    if ts is None:
        per_seq_elem = 2 * tb * Din * x_item      # double-buffered x, per seq row
        ts = int(max((budget - fixed_bytes) // max(per_seq_elem, 1), 8))
        ts = min(ts, 128)                         # amortize ~0.35us/step; cap
    if ts >= S:
        ts = S                                    # single seq step (full dim)
    else:
        ts = max(8, (ts // 8) * 8)                # (8,128) sublane rule

    grid = (_cdiv(B, tb), _cdiv(S, ts))
    rem = S - (grid[1] - 1) * ts                  # valid rows in last seq tile
    full_tile = (rem == ts)

    x_bytes = 2 * tb * ts * Din * x_item
    if vmem_limit_bytes is None:
        want = int((fixed_bytes + x_bytes + const_bytes) * 1.25) + 4 * 1024 * 1024
        vmem_limit_bytes = max(16 * 1024 * 1024,
                               min(want, phys - 2 * 1024 * 1024))

    kernel = functools.partial(_expert_linear_kernel,
                               inv_s=1.0 / float(S), rem=rem,
                               full_tile=full_tile)

    def _run(single_buffer_consts):
        if single_buffer_consts:
            def const_spec(shape):
                return pl.BlockSpec(shape, lambda b, s: (0,) * len(shape),
                                    pipeline_mode=pl.Buffered(1))
        else:
            def const_spec(shape):
                return pl.BlockSpec(shape, lambda b, s: (0,) * len(shape))

        return pl.pallas_call(
            kernel,
            out_shape=jax.ShapeDtypeStruct((B, Hp), jnp.float32),
            grid_spec=pltpu.PrefetchScalarGridSpec(
                num_scalar_prefetch=0,
                grid=grid,
                in_specs=[
                    pl.BlockSpec((tb, ts, Din), lambda b, s: (b, s, 0)),  # x
                    const_spec((Din, h2)),                                # w1
                    const_spec((1, h2)),                                  # b1
                    const_spec((1, h2)),                                  # gamma
                    const_spec((1, h2)),                                  # beta
                    const_spec((h2, Hp)),                                 # w2
                    const_spec((1, Hp)),                                  # b2
                ],
                out_specs=pl.BlockSpec((tb, Hp), lambda b, s: (b, 0)),
                scratch_shapes=[pltpu.VMEM((tb, Din), jnp.float32)],
            ),
            compiler_params=pltpu.CompilerParams(
                dimension_semantics=("parallel", "arbitrary"),
                vmem_limit_bytes=int(vmem_limit_bytes)),
        )(x, w1, b1, gamma, beta, w2, b2)

    try:
        out_p = _run(True)
    except Exception:
        # pipeline_mode=pl.Buffered(1) not supported on this jax version:
        # fall back to default (double-buffered) constant operands.
        out_p = _run(False)

    return out_p[:, :H]


def init_params(key, input_size, hidden_size):
    """Deterministic synthetic parameters mirroring the nn.Module shapes.
    Linear weights stored as (in, out) (i.e. transposed w.r.t. PyTorch)."""
    k1, k2, k3, k4 = jax.random.split(key, 4)
    h2 = hidden_size * 2
    w1 = jax.random.normal(k1, (input_size, h2), jnp.float32) * 0.05
    b1 = jax.random.normal(k2, (1, h2), jnp.float32) * 0.01
    gamma = jnp.ones((1, h2), jnp.float32)
    beta = jnp.zeros((1, h2), jnp.float32)
    w2 = jax.random.normal(k3, (h2, hidden_size), jnp.float32) * 0.05
    b2 = jax.random.normal(k4, (1, hidden_size), jnp.float32) * 0.01
    return w1, b1, gamma, beta, w2, b2


def reference(x, w1, b1, gamma, beta, w2, b2):
    """Pure-JAX f32 reference for correctness checking."""
    pooled = jnp.mean(x, axis=1)
    y1 = pooled @ w1 + b1
    mu = jnp.mean(y1, axis=-1, keepdims=True)
    var = jnp.mean((y1 - mu) ** 2, axis=-1, keepdims=True)
    yn = (y1 - mu) / jnp.sqrt(var + 1e-5) * gamma + beta
    act = 0.5 * yn * (1.0 + jax.lax.erf(yn / jnp.sqrt(2.0)))
    return act @ w2 + b2


# TODO(synk): the surrounding DeBERTaMoEClassifier (BERT encoder, LSTM/GRU/RNN
# experts, router softmax, dropout, final classifier) is out of scope here;
# this kernel covers the ExpertLinear expert MLP only.

if __name__ == "__main__":
    B, S, INPUT_SIZE, HIDDEN_SIZE = 2, 8, 32, 32

    key = jax.random.PRNGKey(0)
    kx, kp = jax.random.split(key)
    # Encoder activations arrive in bf16 (halves the dominant HBM read).
    x = jax.random.normal(kx, (B, S, INPUT_SIZE), jnp.float32).astype(jnp.bfloat16)
    params = init_params(kp, INPUT_SIZE, HIDDEN_SIZE)

    out = expert_linear(x, *params)
    out = jax.block_until_ready(out)

    # Reference sees the same bf16-rounded x / weights (kernel matmuls are
    # bf16 with f32 accumulation, hence the modest tolerance).
    p32 = list(params)
    p32[0] = p32[0].astype(jnp.bfloat16).astype(jnp.float32)   # w1
    p32[4] = p32[4].astype(jnp.bfloat16).astype(jnp.float32)   # w2
    ref = reference(x.astype(jnp.float32), *p32)

    assert out.shape == (B, HIDDEN_SIZE)
    err = float(jnp.max(jnp.abs(out - ref)))
    assert jnp.allclose(out, ref, atol=2e-2, rtol=2e-2), f"max abs err {err}"

    print("KERNEL_OK")
</pallas_src>

<mosaic_0001>
module attributes {stable_mosaic.version = 11 : i64} {
  func.func @_expert_linear_kernel(%arg0: i32, %arg1: i32, %arg2: memref<2x8x32xbf16, #tpu.memory_space<vmem>>, %arg3: memref<32x64xbf16, #tpu.memory_space<vmem>>, %arg4: memref<1x64xf32, #tpu.memory_space<vmem>>, %arg5: memref<1x64xf32, #tpu.memory_space<vmem>>, %arg6: memref<1x64xf32, #tpu.memory_space<vmem>>, %arg7: memref<64x128xbf16, #tpu.memory_space<vmem>>, %arg8: memref<1x128xf32, #tpu.memory_space<vmem>>, %arg9: memref<2x128xf32, #tpu.memory_space<vmem>>, %arg10: memref<2x32xf32, #tpu.memory_space<vmem>>) attributes {dimension_semantics = [#tpu.dimension_semantics<parallel>, #tpu.dimension_semantics<arbitrary>], iteration_bounds = array<i64: 1, 1>, scalar_prefetch = 0 : i64, scratch_operands = 1 : i64, tpu.core_type = #tpu.core_type<tc>, window_params = [{transform_indices = @transform_0, window_bounds = array<i64: 2, 8, 32>}, {pipeline_mode = #tpu.pipeline_mode<synchronous>, transform_indices = @transform_1, window_bounds = array<i64: 32, 64>}, {pipeline_mode = #tpu.pipeline_mode<synchronous>, transform_indices = @transform_2, window_bounds = array<i64: 1, 64>}, {pipeline_mode = #tpu.pipeline_mode<synchronous>, transform_indices = @transform_3, window_bounds = array<i64: 1, 64>}, {pipeline_mode = #tpu.pipeline_mode<synchronous>, transform_indices = @transform_4, window_bounds = array<i64: 1, 64>}, {pipeline_mode = #tpu.pipeline_mode<synchronous>, transform_indices = @transform_5, window_bounds = array<i64: 64, 128>}, {pipeline_mode = #tpu.pipeline_mode<synchronous>, transform_indices = @transform_6, window_bounds = array<i64: 1, 128>}, {transform_indices = @transform_7, window_bounds = array<i64: 2, 128>}]} {
    %c0_i32 = arith.constant 0 : i32
    %0 = arith.cmpi eq, %arg1, %c0_i32 : i32
    %1 = arith.extui %0 : i1 to i32
    %c0_i32_0 = arith.constant 0 : i32
    %2 = arith.cmpi ne, %1, %c0_i32_0 : i32
    scf.if %2 {
      %cst_9 = arith.constant 0.000000e+00 : f32
      %12 = vector.broadcast %cst_9 : f32 to vector<2x32xf32>
      %c0_10 = arith.constant 0 : index
      %c0_11 = arith.constant 0 : index
      %13 = vector.load %arg10[%c0_10, %c0_11] : memref<2x32xf32, #tpu.memory_space<vmem>>, vector<2x32xf32>
      tpu.vector_store %arg10[%c0_10, %c0_11], %12 {strides = array<i32>} : memref<2x32xf32, #tpu.memory_space<vmem>>, vector<2x32xf32>,
    } else {
    }
    %c0 = arith.constant 0 : index
    %c0_1 = arith.constant 0 : index
    %c0_2 = arith.constant 0 : index
    %3 = vector.load %arg2[%c0, %c0_1, %c0_2] : memref<2x8x32xbf16, #tpu.memory_space<vmem>>, vector<2x8x32xbf16>
    %4 = arith.extf %3 : vector<2x8x32xbf16> to vector<2x8x32xf32>
    %c0_3 = arith.constant 0 : index
    %c0_4 = arith.constant 0 : index
    %5 = vector.load %arg10[%c0_3, %c0_4] : memref<2x32xf32, #tpu.memory_space<vmem>>, vector<2x32xf32>
    %cst = arith.constant dense<0.000000e+00> : vector<2x32xf32>
    %6 = vector.multi_reduction <add>, %4, %cst [1] : vector<2x8x32xf32> to vector<2x32xf32>
    %7 = arith.addf %5, %6 : vector<2x32xf32>
    %c0_5 = arith.constant 0 : index
    %c0_6 = arith.constant 0 : index
    %8 = vector.load %arg10[%c0_5, %c0_6] : memref<2x32xf32, #tpu.memory_space<vmem>>, vector<2x32xf32>
    tpu.vector_store %arg10[%c0_5, %c0_6], %7 {strides = array<i32>} : memref<2x32xf32, #tpu.memory_space<vmem>>, vector<2x32xf32>,
    %c0_i32_7 = arith.constant 0 : i32
    %9 = arith.cmpi eq, %arg1, %c0_i32_7 : i32
    %10 = arith.extui %9 : i1 to i32
    %c0_i32_8 = arith.constant 0 : i32
    %11 = arith.cmpi ne, %10, %c0_i32_8 : i32
    scf.if %11 {
      %c0_9 = arith.constant 0 : index
      %c0_10 = arith.constant 0 : index
      %12 = vector.load %arg10[%c0_9, %c0_10] : memref<2x32xf32, #tpu.memory_space<vmem>>, vector<2x32xf32>
      %cst_11 = arith.constant 1.250000e-01 : f32
      %13 = vector.broadcast %cst_11 : f32 to vector<2x32xf32>
      %14 = arith.mulf %12, %13 : vector<2x32xf32>
      %15 = arith.truncf %14 : vector<2x32xf32> to vector<2x32xbf16>
      %c0_12 = arith.constant 0 : index
      %c0_13 = arith.constant 0 : index
      %16 = vector.load %arg3[%c0_12, %c0_13] : memref<32x64xbf16, #tpu.memory_space<vmem>>, vector<32x64xbf16>
      %cst_14 = arith.constant dense<0.000000e+00> : vector<2x64xf32>
      %17 = tpu.matmul %15, %16, %cst_14 {dimension_numbers = #tpu.dot_dimension_numbers<[1], [0], [0], [1], [0, 0, 1, 1], [], []>} : vector<2x32xbf16>, vector<32x64xbf16>, vector<2x64xf32> -> vector<2x64xf32>
      %c0_15 = arith.constant 0 : index
      %c0_16 = arith.constant 0 : index
      %18 = vector.load %arg4[%c0_15, %c0_16] : memref<1x64xf32, #tpu.memory_space<vmem>>, vector<1x64xf32>
      %19 = vector.broadcast %18 : vector<1x64xf32> to vector<2x64xf32>
      %20 = arith.addf %17, %19 : vector<2x64xf32>
      %cst_17 = arith.constant dense<0.000000e+00> : vector<2xf32>
      %21 = vector.multi_reduction <add>, %20, %cst_17 [1] : vector<2x64xf32> to vector<2xf32>
      %22 = vector.shape_cast %21 : vector<2xf32> to vector<2x1xf32>
      %cst_18 = arith.constant 6.400000e+01 : f32
      %23 = vector.broadcast %cst_18 : f32 to vector<2x1xf32>
      %24 = arith.divf %22, %23 : vector<2x1xf32>
      %25 = arith.mulf %20, %20 : vector<2x64xf32>
      %cst_19 = arith.constant dense<0.000000e+00> : vector<2xf32>
      %26 = vector.multi_reduction <add>, %25, %cst_19 [1] : vector<2x64xf32> to vector<2xf32>
      %27 = vector.shape_cast %26 : vector<2xf32> to vector<2x1xf32>
      %cst_20 = arith.constant 6.400000e+01 : f32
      %28 = vector.broadcast %cst_20 : f32 to vector<2x1xf32>
      %29 = arith.divf %27, %28 : vector<2x1xf32>
      %30 = arith.mulf %24, %24 : vector<2x1xf32>
      %31 = arith.subf %29, %30 : vector<2x1xf32>
      %cst_21 = arith.constant 0.000000e+00 : f32
      %32 = vector.broadcast %cst_21 : f32 to vector<2x1xf32>
      %33 = arith.maximumf %31, %32 : vector<2x1xf32>
      %34 = vector.broadcast %24 : vector<2x1xf32> to vector<2x64xf32>
      %35 = arith.subf %20, %34 : vector<2x64xf32>
      %cst_22 = arith.constant 9.99999974E-6 : f32
      %36 = vector.broadcast %cst_22 : f32 to vector<2x1xf32>
      %37 = arith.addf %33, %36 : vector<2x1xf32>
      %38 = math.rsqrt %37 : vector<2x1xf32>
      %39 = vector.broadcast %38 : vector<2x1xf32> to vector<2x64xf32>
      %40 = arith.mulf %35, %39 : vector<2x64xf32>
      %c0_23 = arith.constant 0 : index
      %c0_24 = arith.constant 0 : index
      %41 = vector.load %arg5[%c0_23, %c0_24] : memref<1x64xf32, #tpu.memory_space<vmem>>, vector<1x64xf32>
      %42 = vector.broadcast %41 : vector<1x64xf32> to vector<2x64xf32>
      %43 = arith.mulf %40, %42 : vector<2x64xf32>
      %c0_25 = arith.constant 0 : index
      %c0_26 = arith.constant 0 : index
      %44 = vector.load %arg6[%c0_25, %c0_26] : memref<1x64xf32, #tpu.memory_space<vmem>>, vector<1x64xf32>
      %45 = vector.broadcast %44 : vector<1x64xf32> to vector<2x64xf32>
      %46 = arith.addf %43, %45 : vector<2x64xf32>
      %cst_27 = arith.constant 5.000000e-01 : f32
      %47 = vector.broadcast %cst_27 : f32 to vector<2x64xf32>
      %48 = arith.mulf %47, %46 : vector<2x64xf32>
      %cst_28 = arith.constant 0.707106769 : f32
      %49 = vector.broadcast %cst_28 : f32 to vector<2x64xf32>
      %50 = arith.mulf %46, %49 : vector<2x64xf32>
      %51 = math.erf %50 : vector<2x64xf32>
      %cst_29 = arith.constant 1.000000e+00 : f32
      %52 = vector.broadcast %cst_29 : f32 to vector<2x64xf32>
      %53 = arith.addf %52, %51 : vector<2x64xf32>
      %54 = arith.mulf %48, %53 : vector<2x64xf32>
      %55 = arith.truncf %54 : vector<2x64xf32> to vector<2x64xbf16>
      %c0_30 = arith.constant 0 : index
      %c0_31 = arith.constant 0 : index
      %56 = vector.load %arg7[%c0_30, %c0_31] : memref<64x128xbf16, #tpu.memory_space<vmem>>, vector<64x128xbf16>
      %cst_32 = arith.constant dense<0.000000e+00> : vector<2x128xf32>
      %57 = tpu.matmul %55, %56, %cst_32 {dimension_numbers = #tpu.dot_dimension_numbers<[1], [0], [0], [1], [0, 0, 1, 1], [], []>} : vector<2x64xbf16>, vector<64x128xbf16>, vector<2x128xf32> -> vector<2x128xf32>
      %c0_33 = arith.constant 0 : index
      %c0_34 = arith.constant 0 : index
      %58 = vector.load %arg8[%c0_33, %c0_34] : memref<1x128xf32, #tpu.memory_space<vmem>>, vector<1x128xf32>
      %59 = vector.broadcast %58 : vector<1x128xf32> to vector<2x128xf32>
      %60 = arith.addf %57, %59 : vector<2x128xf32>
      %c0_35 = arith.constant 0 : index
      %c0_36 = arith.constant 0 : index
      %61 = vector.load %arg9[%c0_35, %c0_36] : memref<2x128xf32, #tpu.memory_space<vmem>>, vector<2x128xf32>
      tpu.vector_store %arg9[%c0_35, %c0_36], %60 {strides = array<i32>} : memref<2x128xf32, #tpu.memory_space<vmem>>, vector<2x128xf32>,
    } else {
    }
    return
  }
  func.func @transform_0(%arg0: i32, %arg1: i32) -> (i32, i32, i32) {
    %c0_i32 = arith.constant 0 : i32
    %c0_i32_0 = arith.constant 0 : i32
    return %arg0, %arg1, %c0_i32 : i32, i32, i32
  }
  func.func @transform_1(%arg0: i32, %arg1: i32) -> (i32, i32) {
    %c0_i32 = arith.constant 0 : i32
    %c0_i32_0 = arith.constant 0 : i32
    %c0_i32_1 = arith.constant 0 : i32
    return %c0_i32, %c0_i32_0 : i32, i32
  }
  func.func @transform_2(%arg0: i32, %arg1: i32) -> (i32, i32) {
    %c0_i32 = arith.constant 0 : i32
    %c0_i32_0 = arith.constant 0 : i32
    %c0_i32_1 = arith.constant 0 : i32
    return %c0_i32, %c0_i32_0 : i32, i32
  }
  func.func @transform_3(%arg0: i32, %arg1: i32) -> (i32, i32) {
    %c0_i32 = arith.constant 0 : i32
    %c0_i32_0 = arith.constant 0 : i32
    %c0_i32_1 = arith.constant 0 : i32
    return %c0_i32, %c0_i32_0 : i32, i32
  }
  func.func @transform_4(%arg0: i32, %arg1: i32) -> (i32, i32) {
    %c0_i32 = arith.constant 0 : i32
    %c0_i32_0 = arith.constant 0 : i32
    %c0_i32_1 = arith.constant 0 : i32
    return %c0_i32, %c0_i32_0 : i32, i32
  }
  func.func @transform_5(%arg0: i32, %arg1: i32) -> (i32, i32) {
    %c0_i32 = arith.constant 0 : i32
    %c0_i32_0 = arith.constant 0 : i32
    %c0_i32_1 = arith.constant 0 : i32
    return %c0_i32, %c0_i32_0 : i32, i32
  }
  func.func @transform_6(%arg0: i32, %arg1: i32) -> (i32, i32) {
    %c0_i32 = arith.constant 0 : i32
    %c0_i32_0 = arith.constant 0 : i32
    %c0_i32_1 = arith.constant 0 : i32
    return %c0_i32, %c0_i32_0 : i32, i32
  }
  func.func @transform_7(%arg0: i32, %arg1: i32) -> (i32, i32) {
    %c0_i32 = arith.constant 0 : i32
    %c0_i32_0 = arith.constant 0 : i32
    return %arg0, %c0_i32 : i32, i32
  }
}

module attributes {stable_mosaic.version = 11 : i64} {
  func.func @_expert_linear_kernel(%arg0: i32, %arg1: i32, %arg2: memref<2x8x32xbf16, #tpu.memory_space<vmem>>, %arg3: memref<32x64xbf16, #tpu.memory_space<vmem>>, %arg4: memref<1x64xf32, #tpu.memory_space<vmem>>, %arg5: memref<1x64xf32, #tpu.memory_space<vmem>>, %arg6: memref<1x64xf32, #tpu.memory_space<vmem>>, %arg7: memref<64x128xbf16, #tpu.memory_space<vmem>>, %arg8: memref<1x128xf32, #tpu.memory_space<vmem>>, %arg9: memref<2x128xf32, #tpu.memory_space<vmem>>, %arg10: memref<2x32xf32, #tpu.memory_space<vmem>>) attributes {dimension_semantics = [#tpu.dimension_semantics<parallel>, #tpu.dimension_semantics<arbitrary>], iteration_bounds = array<i64: 1, 1>, scalar_prefetch = 0 : i64, scratch_operands = 1 : i64, tpu.core_type = #tpu.core_type<tc>, window_params = [{transform_indices = @transform_0, window_bounds = array<i64: 2, 8, 32>}, {pipeline_mode = #tpu.pipeline_mode<synchronous>, transform_indices = @transform_1, window_bounds = array<i64: 32, 64>}, {pipeline_mode = #tpu.pipeline_mode<synchronous>, transform_indices = @transform_2, window_bounds = array<i64: 1, 64>}, {pipeline_mode = #tpu.pipeline_mode<synchronous>, transform_indices = @transform_3, window_bounds = array<i64: 1, 64>}, {pipeline_mode = #tpu.pipeline_mode<synchronous>, transform_indices = @transform_4, window_bounds = array<i64: 1, 64>}, {pipeline_mode = #tpu.pipeline_mode<synchronous>, transform_indices = @transform_5, window_bounds = array<i64: 64, 128>}, {pipeline_mode = #tpu.pipeline_mode<synchronous>, transform_indices = @transform_6, window_bounds = array<i64: 1, 128>}, {transform_indices = @transform_7, window_bounds = array<i64: 2, 128>}]} {
    %c0_i32 = arith.constant 0 : i32
    %0 = arith.cmpi eq, %arg1, %c0_i32 : i32
    %1 = arith.extui %0 : i1 to i32
    %c0_i32_0 = arith.constant 0 : i32
    %2 = arith.cmpi ne, %1, %c0_i32_0 : i32
    scf.if %2 {
      %cst_9 = arith.constant 0.000000e+00 : f32
      %12 = vector.broadcast %cst_9 : f32 to vector<2x32xf32>
      %c0_10 = arith.constant 0 : index
      %c0_11 = arith.constant 0 : index
      %13 = vector.load %arg10[%c0_10, %c0_11] : memref<2x32xf32, #tpu.memory_space<vmem>>, vector<2x32xf32>
      tpu.vector_store %arg10[%c0_10, %c0_11], %12 {strides = array<i32>} : memref<2x32xf32, #tpu.memory_space<vmem>>, vector<2x32xf32>,
    } else {
    }
    %c0 = arith.constant 0 : index
    %c0_1 = arith.constant 0 : index
    %c0_2 = arith.constant 0 : index
    %3 = vector.load %arg2[%c0, %c0_1, %c0_2] : memref<2x8x32xbf16, #tpu.memory_space<vmem>>, vector<2x8x32xbf16>
    %4 = arith.extf %3 : vector<2x8x32xbf16> to vector<2x8x32xf32>
    %c0_3 = arith.constant 0 : index
    %c0_4 = arith.constant 0 : index
    %5 = vector.load %arg10[%c0_3, %c0_4] : memref<2x32xf32, #tpu.memory_space<vmem>>, vector<2x32xf32>
    %cst = arith.constant dense<0.000000e+00> : vector<2x32xf32>
    %6 = vector.multi_reduction <add>, %4, %cst [1] : vector<2x8x32xf32> to vector<2x32xf32>
    %7 = arith.addf %5, %6 : vector<2x32xf32>
    %c0_5 = arith.constant 0 : index
    %c0_6 = arith.constant 0 : index
    %8 = vector.load %arg10[%c0_5, %c0_6] : memref<2x32xf32, #tpu.memory_space<vmem>>, vector<2x32xf32>
    tpu.vector_store %arg10[%c0_5, %c0_6], %7 {strides = array<i32>} : memref<2x32xf32, #tpu.memory_space<vmem>>, vector<2x32xf32>,
    %c0_i32_7 = arith.constant 0 : i32
    %9 = arith.cmpi eq, %arg1, %c0_i32_7 : i32
    %10 = arith.extui %9 : i1 to i32
    %c0_i32_8 = arith.constant 0 : i32
    %11 = arith.cmpi ne, %10, %c0_i32_8 : i32
    scf.if %11 {
      %c0_9 = arith.constant 0 : index
      %c0_10 = arith.constant 0 : index
      %12 = vector.load %arg10[%c0_9, %c0_10] : memref<2x32xf32, #tpu.memory_space<vmem>>, vector<2x32xf32>
      %cst_11 = arith.constant 1.250000e-01 : f32
      %13 = vector.broadcast %cst_11 : f32 to vector<2x32xf32>
      %14 = arith.mulf %12, %13 : vector<2x32xf32>
      %15 = arith.truncf %14 : vector<2x32xf32> to vector<2x32xbf16>
      %c0_12 = arith.constant 0 : index
      %c0_13 = arith.constant 0 : index
      %16 = vector.load %arg3[%c0_12, %c0_13] : memref<32x64xbf16, #tpu.memory_space<vmem>>, vector<32x64xbf16>
      %cst_14 = arith.constant dense<0.000000e+00> : vector<2x64xf32>
      %17 = tpu.matmul %15, %16, %cst_14 {dimension_numbers = #tpu.dot_dimension_numbers<[1], [0], [0], [1], [0, 0, 1, 1], [], []>} : vector<2x32xbf16>, vector<32x64xbf16>, vector<2x64xf32> -> vector<2x64xf32>
      %c0_15 = arith.constant 0 : index
      %c0_16 = arith.constant 0 : index
      %18 = vector.load %arg4[%c0_15, %c0_16] : memref<1x64xf32, #tpu.memory_space<vmem>>, vector<1x64xf32>
      %19 = vector.broadcast %18 : vector<1x64xf32> to vector<2x64xf32>
      %20 = arith.addf %17, %19 : vector<2x64xf32>
      %cst_17 = arith.constant dense<0.000000e+00> : vector<2xf32>
      %21 = vector.multi_reduction <add>, %20, %cst_17 [1] : vector<2x64xf32> to vector<2xf32>
      %22 = vector.shape_cast %21 : vector<2xf32> to vector<2x1xf32>
      %cst_18 = arith.constant 6.400000e+01 : f32
      %23 = vector.broadcast %cst_18 : f32 to vector<2x1xf32>
      %24 = arith.divf %22, %23 : vector<2x1xf32>
      %25 = arith.mulf %20, %20 : vector<2x64xf32>
      %cst_19 = arith.constant dense<0.000000e+00> : vector<2xf32>
      %26 = vector.multi_reduction <add>, %25, %cst_19 [1] : vector<2x64xf32> to vector<2xf32>
      %27 = vector.shape_cast %26 : vector<2xf32> to vector<2x1xf32>
      %cst_20 = arith.constant 6.400000e+01 : f32
      %28 = vector.broadcast %cst_20 : f32 to vector<2x1xf32>
      %29 = arith.divf %27, %28 : vector<2x1xf32>
      %30 = arith.mulf %24, %24 : vector<2x1xf32>
      %31 = arith.subf %29, %30 : vector<2x1xf32>
      %cst_21 = arith.constant 0.000000e+00 : f32
      %32 = vector.broadcast %cst_21 : f32 to vector<2x1xf32>
      %33 = arith.maximumf %31, %32 : vector<2x1xf32>
      %34 = vector.broadcast %24 : vector<2x1xf32> to vector<2x64xf32>
      %35 = arith.subf %20, %34 : vector<2x64xf32>
      %cst_22 = arith.constant 9.99999974E-6 : f32
      %36 = vector.broadcast %cst_22 : f32 to vector<2x1xf32>
      %37 = arith.addf %33, %36 : vector<2x1xf32>
      %38 = math.rsqrt %37 : vector<2x1xf32>
      %39 = vector.broadcast %38 : vector<2x1xf32> to vector<2x64xf32>
      %40 = arith.mulf %35, %39 : vector<2x64xf32>
      %c0_23 = arith.constant 0 : index
      %c0_24 = arith.constant 0 : index
      %41 = vector.load %arg5[%c0_23, %c0_24] : memref<1x64xf32, #tpu.memory_space<vmem>>, vector<1x64xf32>
      %42 = vector.broadcast %41 : vector<1x64xf32> to vector<2x64xf32>
      %43 = arith.mulf %40, %42 : vector<2x64xf32>
      %c0_25 = arith.constant 0 : index
      %c0_26 = arith.constant 0 : index
      %44 = vector.load %arg6[%c0_25, %c0_26] : memref<1x64xf32, #tpu.memory_space<vmem>>, vector<1x64xf32>
      %45 = vector.broadcast %44 : vector<1x64xf32> to vector<2x64xf32>
      %46 = arith.addf %43, %45 : vector<2x64xf32>
      %cst_27 = arith.constant 5.000000e-01 : f32
      %47 = vector.broadcast %cst_27 : f32 to vector<2x64xf32>
      %48 = arith.mulf %47, %46 : vector<2x64xf32>
      %cst_28 = arith.constant 0.707106769 : f32
      %49 = vector.broadcast %cst_28 : f32 to vector<2x64xf32>
      %50 = arith.mulf %46, %49 : vector<2x64xf32>
      %51 = math.erf %50 : vector<2x64xf32>
      %cst_29 = arith.constant 1.000000e+00 : f32
      %52 = vector.broadcast %cst_29 : f32 to vector<2x64xf32>
      %53 = arith.addf %52, %51 : vector<2x64xf32>
      %54 = arith.mulf %48, %53 : vector<2x64xf32>
      %55 = arith.truncf %54 : vector<2x64xf32> to vector<2x64xbf16>
      %c0_30 = arith.constant 0 : index
      %c0_31 = arith.constant 0 : index
      %56 = vector.load %arg7[%c0_30, %c0_31] : memref<64x128xbf16, #tpu.memory_space<vmem>>, vector<64x128xbf16>
      %cst_32 = arith.constant dense<0.000000e+00> : vector<2x128xf32>
      %57 = tpu.matmul %55, %56, %cst_32 {dimension_numbers = #tpu.dot_dimension_numbers<[1], [0], [0], [1], [0, 0, 1, 1], [], []>} : vector<2x64xbf16>, vector<64x128xbf16>, vector<2x128xf32> -> vector<2x128xf32>
      %c0_33 = arith.constant 0 : index
      %c0_34 = arith.constant 0 : index
      %58 = vector.load %arg8[%c0_33, %c0_34] : memref<1x128xf32, #tpu.memory_space<vmem>>, vector<1x128xf32>
      %59 = vector.broadcast %58 : vector<1x128xf32> to vector<2x128xf32>
      %60 = arith.addf %57, %59 : vector<2x128xf32>
      %c0_35 = arith.constant 0 : index
      %c0_36 = arith.constant 0 : index
      %61 = vector.load %arg9[%c0_35, %c0_36] : memref<2x128xf32, #tpu.memory_space<vmem>>, vector<2x128xf32>
      tpu.vector_store %arg9[%c0_35, %c0_36], %60 {strides = array<i32>} : memref<2x128xf32, #tpu.memory_space<vmem>>, vector<2x128xf32>,
    } else {
    }
    return
  }
  func.func @transform_0(%arg0: i32, %arg1: i32) -> (i32, i32, i32) {
    %c0_i32 = arith.constant 0 : i32
    %c0_i32_0 = arith.constant 0 : i32
    return %arg0, %arg1, %c0_i32 : i32, i32, i32
  }
  func.func @transform_1(%arg0: i32, %arg1: i32) -> (i32, i32) {
    %c0_i32 = arith.constant 0 : i32
    %c0_i32_0 = arith.constant 0 : i32
    %c0_i32_1 = arith.constant 0 : i32
    return %c0_i32, %c0_i32_0 : i32, i32
  }
  func.func @transform_2(%arg0: i32, %arg1: i32) -> (i32, i32) {
    %c0_i32 = arith.constant 0 : i32
    %c0_i32_0 = arith.constant 0 : i32
    %c0_i32_1 = arith.constant 0 : i32
    return %c0_i32, %c0_i32_0 : i32, i32
  }
  func.func @transform_3(%arg0: i32, %arg1: i32) -> (i32, i32) {
    %c0_i32 = arith.constant 0 : i32
    %c0_i32_0 = arith.constant 0 : i32
    %c0_i32_1 = arith.constant 0 : i32
    return %c0_i32, %c0_i32_0 : i32, i32
  }
  func.func @transform_4(%arg0: i32, %arg1: i32) -> (i32, i32) {
    %c0_i32 = arith.constant 0 : i32
    %c0_i32_0 = arith.constant 0 : i32
    %c0_i32_1 = arith.constant 0 : i32
    return %c0_i32, %c0_i32_0 : i32, i32
  }
  func.func @transform_5(%arg0: i32, %arg1: i32) -> (i32, i32) {
    %c0_i32 = arith.constant 0 : i32
    %c0_i32_0 = arith.constant 0 : i32
    %c0_i32_1 = arith.constant 0 : i32
    return %c0_i32, %c0_i32_0 : i32, i32
  }
  func.func @transform_6(%arg0: i32, %arg1: i32) -> (i32, i32) {
    %c0_i32 = arith.constant 0 : i32
    %c0_i32_0 = arith.constant 0 : i32
    %c0_i32_1 = arith.constant 0 : i32
    return %c0_i32, %c0_i32_0 : i32, i32
  }
  func.func @transform_7(%arg0: i32, %arg1: i32) -> (i32, i32) {
    %c0_i32 = arith.constant 0 : i32
    %c0_i32_0 = arith.constant 0 : i32
    return %arg0, %c0_i32 : i32, i32
  }
}

</mosaic_0001>

<llo_original>
// kernel: tpu_custom_call.1
$region0: #{tpu_custom_call.1}
  #allocation0 [shape = 'u32[]', space=smem, size = 0x4, offset = 0x4, fixed_abs, tag = 'smem constant byte address 0x4 - core index']
  #allocation1 [shape = 'u32[144,128]{1,0:T(1,128)}', space=vmem, size = 0x12000, scoped, tag = 'internal scratch']
  #allocation2 [shape = 'f32[2,32]{1,0:T(2,128)}', space=vmem, size = 0x400, scoped, tag = 'scratch operand']
  %s0 = inlined_call_operand.hbm [shape: bf16[2,8,32], index: 0, kind: input, shape index: {}]
  %s1 = inlined_call_operand.hbm [shape: bf16[32,64], index: 1, kind: input, shape index: {}]
  %s2 = inlined_call_operand.vmem [shape: f32[1,64], index: 2, kind: input, shape index: {}]
  %s3 = inlined_call_operand.vmem [shape: f32[1,64], index: 3, kind: input, shape index: {}]
  %s4 = inlined_call_operand.vmem [shape: f32[1,64], index: 4, kind: input, shape index: {}]
  %s5 = inlined_call_operand.hbm [shape: bf16[64,128], index: 5, kind: input, shape index: {}]
  %s6 = inlined_call_operand.vmem [shape: f32[1,128], index: 6, kind: input, shape index: {}]
  %s7 = inlined_call_operand.hbm [shape: f32[2,128], index: 7, kind: output, shape index: {}]
  %s8 = sld [smem:[#allocation0]]
  $region58: #{tpu_custom_call.1} parent=0
    _
  %s10 = ssub.s32 1, %s8
  %s11 = scalar_select 0, %s10, %s8
  $region1: #{tpu_custom_call.1} parent=0
    #allocation3 [shape = 'u8[4096]{0}', space=vmem, size = 0x1000, scoped, tag = 'input window, operand 0, single buffered']
    #allocation4 [shape = 's32[1]{0}', space=sflag, size = 0x4, scoped, tag = 'scoped memory for tpu_custom_call.1']
    #allocation5 [shape = 's32[1]{0}', space=sflag, size = 0x4, scoped, tag = 'scoped memory for tpu_custom_call.1']
    #allocation6 [shape = 'u8[8192]{0}', space=vmem, size = 0x2000, scoped, tag = 'input window, operand 1, single buffered']
    #allocation7 [shape = 's32[1]{0}', space=sflag, size = 0x4, scoped, tag = 'scoped memory for tpu_custom_call.1']
    #allocation8 [shape = 'u8[16384]{0}', space=vmem, size = 0x4000, scoped, tag = 'input window, operand 5, single buffered']
    #allocation9 [shape = 'u8[1024]{0}', space=vmem, size = 0x400, scoped, tag = 'output window, operand 0, single buffered']
    %12 = vsyncpa [#allocation4], 0
    %13 = vsyncpa [#allocation7], 0
    %14 = vsyncpa [#allocation5], 0
    // Predicated region
    $region2: #{tpu_custom_call.1} parent=1 // pred_check
      _
    $region3: #{tpu_custom_call.1} parent=1 // pred_check_branch
      %16 = sbr.rel (0) target = $region5
    $region4: #{tpu_custom_call.1} parent=1 // pred_region
      %s18 = ssub.s32 128, 128
      %19 = vsyncadd [#allocation4], %s18
      %s20 = sshll.u32 [#allocation3], 4
      %s21 = int_to_ptr.vmem [resolvable:$true] %s20
      %26 = dma.hbm_to_vmem [thread:$0]  %s0, 128, %s21, [#allocation4], 64, 64, 4
    $region5: #{tpu_custom_call.1} parent=1 // pred_fallthru
      _
    // Predicated region
    $region6: #{tpu_custom_call.1} parent=1 // pred_check
      _
    $region7: #{tpu_custom_call.1} parent=1 // pred_check_branch
      %28 = sbr.rel (0) target = $region9
    $region8: #{tpu_custom_call.1} parent=1 // pred_region
      %s30 = ssub.s32 256, 256
      %31 = vsyncadd [#allocation7], %s30
      %s32 = sshll.u32 [#allocation6], 4
      %s33 = int_to_ptr.vmem [resolvable:$true] %s32
      %38 = dma.hbm_to_vmem [thread:$0]  %s1, 256, %s33, [#allocation7], 64, 64, 4
    $region9: #{tpu_custom_call.1} parent=1 // pred_fallthru
      _
    // Predicated region
    $region10: #{tpu_custom_call.1} parent=1 // pred_check
      _
    $region11: #{tpu_custom_call.1} parent=1 // pred_check_branch
      %40 = sbr.rel (0) target = $region13
    $region12: #{tpu_custom_call.1} parent=1 // pred_region
      _
    $region13: #{tpu_custom_call.1} parent=1 // pred_fallthru
      _
    // Predicated region
    $region14: #{tpu_custom_call.1} parent=1 // pred_check
      _
    $region15: #{tpu_custom_call.1} parent=1 // pred_check_branch
      %42 = sbr.rel (0) target = $region17
    $region16: #{tpu_custom_call.1} parent=1 // pred_region
      _
    $region17: #{tpu_custom_call.1} parent=1 // pred_fallthru
      _
    // Predicated region
    $region18: #{tpu_custom_call.1} parent=1 // pred_check
      _
    $region19: #{tpu_custom_call.1} parent=1 // pred_check_branch
      %44 = sbr.rel (0) target = $region21
    $region20: #{tpu_custom_call.1} parent=1 // pred_region
      _
    $region21: #{tpu_custom_call.1} parent=1 // pred_fallthru
      _
    // Predicated region
    $region22: #{tpu_custom_call.1} parent=1 // pred_check
      _
    $region23: #{tpu_custom_call.1} parent=1 // pred_check_branch
      %46 = sbr.rel (0) target = $region25
    $region24: #{tpu_custom_call.1} parent=1 // pred_region
      %s48 = ssub.s32 512, 512
      %49 = vsyncadd [#allocation7], %s48
      %s50 = sshll.u32 [#allocation8], 4
      %s51 = int_to_ptr.vmem [resolvable:$true] %s50
      %56 = dma.hbm_to_vmem [thread:$0]  %s5, 512, %s51, [#allocation7], 64, 64, 4
    $region25: #{tpu_custom_call.1} parent=1 // pred_fallthru
      _
    // Predicated region
    $region26: #{tpu_custom_call.1} parent=1 // pred_check
      _
    $region27: #{tpu_custom_call.1} parent=1 // pred_check_branch
      %58 = sbr.rel (0) target = $region29
    $region28: #{tpu_custom_call.1} parent=1 // pred_region
      _
    $region29: #{tpu_custom_call.1} parent=1 // pred_fallthru
      _
    // Predicated region
    $region30: #{tpu_custom_call.1} parent=1 // pred_check
      _
    $region31: #{tpu_custom_call.1} parent=1 // pred_check_branch
      %60 = sbr.rel (0) target = $region33
    $region32: #{tpu_custom_call.1} parent=1 // pred_region
      %61 = dma.done [#allocation4], 128
    $region33: #{tpu_custom_call.1} parent=1 // pred_fallthru
      _
    // Predicated region
    $region34: #{tpu_custom_call.1} parent=1 // pred_check
      _
    $region35: #{tpu_custom_call.1} parent=1 // pred_check_branch
      %63 = sbr.rel (0) target = $region37
    $region36: #{tpu_custom_call.1} parent=1 // pred_region
      %64 = dma.done [#allocation7], 256
    $region37: #{tpu_custom_call.1} parent=1 // pred_fallthru
      _
    // Predicated region
    $region38: #{tpu_custom_call.1} parent=1 // pred_check
      _
    $region39: #{tpu_custom_call.1} parent=1 // pred_check_branch
      %66 = sbr.rel (0) target = $region41
    $region40: #{tpu_custom_call.1} parent=1 // pred_region
      %67 = dma.done [#allocation7], 512
    $region41: #{tpu_custom_call.1} parent=1 // pred_fallthru
      _
    %p69 = scmp.eq.s32.totalorder 0, 0
    // Predicated region
    $region42: #{tpu_custom_call.1} parent=1 // pred_check
      %p70 = pneg %p69
    $region43: #{tpu_custom_call.1} parent=1 // pred_check_branch
      %72 = sbr.rel (%p70) target = $region45
    $region44: #{tpu_custom_call.1} parent=1 // pred_region
      %vm73 = vcmask 254976
      %74 = vst.msk [vmem:[#allocation2] sm:$0x3] %vm73, 0.0
    $region45: #{tpu_custom_call.1} parent=1 // pred_fallthru
      _
    %v75 = vld [vmem:[#allocation3] sm:$0xf]
    %v76 = vld [vmem:[#allocation3 + $0x4] sm:$0xf]
    %v77 = vunpack.c.l.bf16 %v75
    %v78 = vunpack.c.l.bf16 %v76
    %v79 = vld [vmem:[#allocation2] sm:$0x3]
    %vm80 = vcmask 261120
    %v81 = vsel %vm80, %v77, 0.0
    %v82 = vrot.slane %v81, 4
    %v83 = vadd.f32 %v81, %v82
    %v84 = vrot.slane %v83, 2
    %v85 = vadd.f32 %v83, %v84
    %v86 = vrot.slane %v85, 1
    %v87 = vadd.f32 %v85, %v86
    %v88 = vsel %vm80, %v78, 0.0
    %v89 = vrot.slane %v88, 4
    %v90 = vadd.f32 %v88, %v89
    %v91 = vrot.slane %v90, 2
    %v92 = vadd.f32 %v90, %v91
    %v93 = vrot.slane %v92, 1
    %v94 = vadd.f32 %v92, %v93
    %vm97 = vcmask 1041409
    %v98 = vsel %vm97, %v94, %v87
    %v100 = vadd.f32 %v79, %v98
    %vm101 = vcmask 254976
    %102 = vst.msk [vmem:[#allocation2] sm:$0x3] %vm101, %v100
    // Predicated region
    $region46: #{tpu_custom_call.1} parent=1 // pred_check
      %p103 = pneg %p69
    $region47: #{tpu_custom_call.1} parent=1 // pred_check_branch
      %105 = sbr.rel (%p103) target = $region49
    $region48: #{tpu_custom_call.1} parent=1 // pred_region
      %v106 = vld [vmem:[#allocation2] sm:$0x3]
      %v107 = vmul.f32 %v106, 0.125
      %v108 = vpack.c.bf16 %v107, %v107
      %v109 = vld [vmem:[#allocation6] sm:$0xf]
      %v110 = vld [vmem:[#allocation6 + $0x4] sm:$0xf]
      %v111 = vld [vmem:[#allocation6 + $0x8] sm:$0xf]
      %v112 = vld [vmem:[#allocation6 + $0xc] sm:$0xf]
      %v113 = vld [vmem:[%s2] sm:$0x1]
      %v115 = vlaneseq
      %v116 = vshrl.u32 %v115, 7
      %v117 = vsub.s32 0, %v116
      %v118 = vrot.slane %v113, %v117
      %v124 = vunpack.c.l.b16 %v109
      %v125 = vunpack.c.l.b16 %v110
      %v126 = vunpack.c.l.b16 %v111
      %v127 = vunpack.c.l.b16 %v112
      %v128 = vpack.c.b16 %v125, %v124
      %v129 = vpack.c.b16 %v127, %v126
      %v133 = vsel %vm80, %v108, 0
      %135 = vmatprep.subr.bf16.mxu0 0
      %136 = vmatpush1.bf16.msra.mxu0 %v128
      %137 = vmatprep.subr.bf16.mxu0 0
      %138 = vmatpush1.bf16.msra.mxu0 %v129
      %139 = vmatprep.subr.bf16.mxu0 0
      %140 = vmatpush1.bf16.msra.mxu0 0
      %141 = vmatprep.subr.bf16.mxu0 0
      %142 = vmatpush1.bf16.msra.mxu0 0
      %143 = vmatprep.subr.bf16.mxu0 0
      %144 = vmatpush1.bf16.msra.mxu0 0
      %145 = vmatprep.subr.bf16.mxu0 0
      %146 = vmatpush1.bf16.msra.mxu0 0
      %147 = vmatprep.subr.bf16.mxu0 0
      %148 = vmatpush1.bf16.msra.mxu0 0
      %149 = vmatprep.subr.bf16.mxu0 0
      %150 = vmatpush1.bf16.msra.mxu0 0
      %151 = vmatprep.subr.bf16.mxu0 0
      %152 = vmatpush1.bf16.msra.mxu0 0
      %153 = vmatprep.subr.bf16.mxu0 0
      %154 = vmatpush1.bf16.msra.mxu0 0
      %155 = vmatprep.subr.bf16.mxu0 0
      %156 = vmatpush1.bf16.msra.mxu0 0
      %157 = vmatprep.subr.bf16.mxu0 0
      %158 = vmatpush1.bf16.msra.mxu0 0
      %159 = vmatprep.subr.bf16.mxu0 0
      %160 = vmatpush1.bf16.msra.mxu0 0
      %161 = vmatprep.subr.bf16.mxu0 0
      %162 = vmatpush1.bf16.msra.mxu0 0
      %163 = vmatprep.subr.bf16.mxu0 0
      %164 = vmatpush1.bf16.msra.mxu0 0
      %165 = vmatprep.subr.bf16.mxu0 0
      %166 = vmatpush1.bf16.msra.mxu0 0
      %167 = vmatprep.mubr.bf16.mxu0 0
      %168 = vmatmul.mubr.bf16.gmra.mrb[0].mxu0 %v133
      %v169 = vpop.f32.mrb[0].mxu0
      %v170 = vadd.f32 %v118, %v169
      %v171 = vpop.f32.mrb[0].mxu0
      %v172 = vpop.f32.mrb[0].mxu0
      %v173 = vpop.f32.mrb[0].mxu0
      %174 = vdwg.mxu0
      %vm175 = vcmask 517120
      %v176 = vsel %vm175, %v170, 0.0
      %177 = vadd.xlane.f32.xlu0 %v176
      %v178 = vpop.xlane.xlu0 %177
      %v179 = vrcp.pop 64.0
      %v180 = vmul.f32 %v178, %v179
      %v181 = vmul.f32 %v170, %v170
      %v182 = vsel %vm175, %v181, 0.0
      %183 = vadd.xlane.f32.xlu0 %v182
      %v184 = vpop.xlane.xlu0 %183
      %v185 = vmul.f32 %v184, %v179
      %v186 = vmul.f32 %v180, %v180
      %v187 = vsub.f32 %v185, %v186
      %v188 = vmax.f32 %v187, 0.0
      %v189 = vsub.f32 %v170, %v180
      %v190 = vadd.f32 %v188, 1e-05
      %v191 = vrsqrt.pop %v190
      %v192 = vmul.f32 %v189, %v191
      %v193 = vld [vmem:[%s3] sm:$0x1]
      %v195 = vlaneseq
      %v196 = vshrl.u32 %v195, 7
      %v197 = vsub.s32 0, %v196
      %v198 = vrot.slane %v193, %v197
      %v200 = vmul.f32 %v192, %v198
      %v201 = vld [vmem:[%s4] sm:$0x1]
      %v203 = vlaneseq
      %v204 = vshrl.u32 %v203, 7
      %v205 = vsub.s32 0, %v204
      %v206 = vrot.slane %v201, %v205
      %v208 = vadd.f32 %v200, %v206
      %v209 = vmul.f32 %v208, 0.5
      %v210 = vmul.f32 %v208, 0.70710677
      %v211 = verf.f32.pop %v210
      %v212 = vadd.f32 %v211, 1.0
      %v213 = vmul.f32 %v209, %v212
      %v214 = vpack.c.bf16 %v213, %v213
      %v215 = vld [vmem:[#allocation8] sm:$0xf]
      %v216 = vld [vmem:[#allocation8 + $0x4] sm:$0xf]
      %v217 = vld [vmem:[#allocation8 + $0x8] sm:$0xf]
      %v218 = vld [vmem:[#allocation8 + $0xc] sm:$0xf]
      %v219 = vld [vmem:[#allocation8 + $0x10] sm:$0xf]
      %v220 = vld [vmem:[#allocation8 + $0x14] sm:$0xf]
      %v221 = vld [vmem:[#allocation8 + $0x18] sm:$0xf]
      %v222 = vld [vmem:[#allocation8 + $0x1c] sm:$0xf]
      %v223 = vld [vmem:[%s6] sm:$0x1]
      %v225 = vlaneseq
      %v226 = vshrl.u32 %v225, 7
      %v227 = vsub.s32 0, %v226
      %v228 = vrot.slane %v223, %v227
      %v238 = vunpack.c.l.b16 %v215
      %v239 = vunpack.c.l.b16 %v216
      %v240 = vunpack.c.l.b16 %v217
      %v241 = vunpack.c.l.b16 %v218
      %v242 = vunpack.c.l.b16 %v219
      %v243 = vunpack.c.l.b16 %v220
      %v244 = vunpack.c.l.b16 %v221
      %v245 = vunpack.c.l.b16 %v222
      %v246 = vpack.c.b16 %v239, %v238
      %v247 = vpack.c.b16 %v241, %v240
      %v248 = vpack.c.b16 %v243, %v242
      %v249 = vpack.c.b16 %v245, %v244
      %vm254 = vcmask 523264
      %v256 = vsel %vm254, %v214, 0
      %258 = vmatprep.subr.bf16.mxu0 0
      %259 = vmatpush1.bf16.msra.mxu0 %v246
      %260 = vmatprep.subr.bf16.mxu0 0
      %261 = vmatpush1.bf16.msra.mxu0 %v247
      %262 = vmatprep.subr.bf16.mxu0 0
      %263 = vmatpush1.bf16.msra.mxu0 %v248
      %264 = vmatprep.subr.bf16.mxu0 0
      %265 = vmatpush1.bf16.msra.mxu0 %v249
      %266 = vmatprep.subr.bf16.mxu0 0
      %267 = vmatpush1.bf16.msra.mxu0 0
      %268 = vmatprep.subr.bf16.mxu0 0
      %269 = vmatpush1.bf16.msra.mxu0 0
      %270 = vmatprep.subr.bf16.mxu0 0
      %271 = vmatpush1.bf16.msra.mxu0 0
      %272 = vmatprep.subr.bf16.mxu0 0
      %273 = vmatpush1.bf16.msra.mxu0 0
      %274 = vmatprep.subr.bf16.mxu0 0
      %275 = vmatpush1.bf16.msra.mxu0 0
      %276 = vmatprep.subr.bf16.mxu0 0
      %277 = vmatpush1.bf16.msra.mxu0 0
      %278 = vmatprep.subr.bf16.mxu0 0
      %279 = vmatpush1.bf16.msra.mxu0 0
      %280 = vmatprep.subr.bf16.mxu0 0
      %281 = vmatpush1.bf16.msra.mxu0 0
      %282 = vmatprep.subr.bf16.mxu0 0
      %283 = vmatpush1.bf16.msra.mxu0 0
      %284 = vmatprep.subr.bf16.mxu0 0
      %285 = vmatpush1.bf16.msra.mxu0 0
      %286 = vmatprep.subr.bf16.mxu0 0
      %287 = vmatpush1.bf16.msra.mxu0 0
      %288 = vmatprep.subr.bf16.mxu0 0
      %289 = vmatpush1.bf16.msra.mxu0 0
      %290 = vmatprep.mubr.bf16.mxu0 0
      %291 = vmatmul.mubr.bf16.gmra.mrb[0].mxu0 %v256
      %v292 = vpop.f32.mrb[0].mxu0
      %v293 = vadd.f32 %v228, %v292
      %v294 = vpop.f32.mrb[0].mxu0
      %v295 = vpop.f32.mrb[0].mxu0
      %v296 = vpop.f32.mrb[0].mxu0
      %297 = vdwg.mxu0
      %298 = vst [vmem:[#allocation9] sm:$0x3] %v293
    $region49: #{tpu_custom_call.1} parent=1 // pred_fallthru
      _
    // Predicated region
    $region50: #{tpu_custom_call.1} parent=1 // pred_check
      _
    $region51: #{tpu_custom_call.1} parent=1 // pred_check_branch
      %300 = sbr.rel (0) target = $region53
    $region52: #{tpu_custom_call.1} parent=1 // pred_region
      %s302 = ssub.s32 32, 32
      %303 = vsyncadd [#allocation5], %s302
      %s305 = sshll.u32 [#allocation9], 4
      %s306 = int_to_ptr.vmem [resolvable:$true] %s305
      %308 = dma.vmem_to_hbm [thread:$0]  %s306, 32, %s7, [#allocation5]
    $region53: #{tpu_custom_call.1} parent=1 // pred_fallthru
      _
    // Predicated region
    $region54: #{tpu_custom_call.1} parent=1 // pred_check
      _
    $region55: #{tpu_custom_call.1} parent=1 // pred_check_branch
      %310 = sbr.rel (0) target = $region57
    $region56: #{tpu_custom_call.1} parent=1 // pred_region
      %311 = dma.done [#allocation5], 32
    $region57: #{tpu_custom_call.1} parent=1 // pred_fallthru
      _
    %312 = vsyncpa [#allocation4], 1
    %313 = vsyncpa [#allocation7], 1
    %314 = vsyncpa [#allocation5], 1

// kernel: tpu_custom_call.1
$region0: #{tpu_custom_call.1}
  #allocation0 [shape = 'u32[]', space=smem, size = 0x4, offset = 0x4, fixed_abs, tag = 'smem constant byte address 0x4 - core index']
  #allocation1 [shape = 'u32[144,128]{1,0:T(1,128)}', space=vmem, size = 0x12000, scoped, tag = 'internal scratch']
  #allocation2 [shape = 'f32[2,32]{1,0:T(2,128)}', space=vmem, size = 0x400, scoped, tag = 'scratch operand']
  %s0 = inlined_call_operand.hbm [shape: bf16[2,8,32], index: 0, kind: input, shape index: {}]
  %s1 = inlined_call_operand.hbm [shape: bf16[32,64], index: 1, kind: input, shape index: {}]
  %s2 = inlined_call_operand.vmem [shape: f32[1,64], index: 2, kind: input, shape index: {}]
  %s3 = inlined_call_operand.vmem [shape: f32[1,64], index: 3, kind: input, shape index: {}]
  %s4 = inlined_call_operand.vmem [shape: f32[1,64], index: 4, kind: input, shape index: {}]
  %s5 = inlined_call_operand.hbm [shape: bf16[64,128], index: 5, kind: input, shape index: {}]
  %s6 = inlined_call_operand.vmem [shape: f32[1,128], index: 6, kind: input, shape index: {}]
  %s7 = inlined_call_operand.hbm [shape: f32[2,128], index: 7, kind: output, shape index: {}]
  %s8 = sld [smem:[#allocation0]]
  $region58: #{tpu_custom_call.1} parent=0
    _
  %s10 = ssub.s32 1, %s8
  %s11 = scalar_select 0, %s10, %s8
  $region1: #{tpu_custom_call.1} parent=0
    #allocation3 [shape = 'u8[4096]{0}', space=vmem, size = 0x1000, scoped, tag = 'input window, operand 0, single buffered']
    #allocation4 [shape = 's32[1]{0}', space=sflag, size = 0x4, scoped, tag = 'scoped memory for tpu_custom_call.1']
    #allocation5 [shape = 's32[1]{0}', space=sflag, size = 0x4, scoped, tag = 'scoped memory for tpu_custom_call.1']
    #allocation6 [shape = 'u8[8192]{0}', space=vmem, size = 0x2000, scoped, tag = 'input window, operand 1, single buffered']
    #allocation7 [shape = 's32[1]{0}', space=sflag, size = 0x4, scoped, tag = 'scoped memory for tpu_custom_call.1']
    #allocation8 [shape = 'u8[16384]{0}', space=vmem, size = 0x4000, scoped, tag = 'input window, operand 5, single buffered']
    #allocation9 [shape = 'u8[1024]{0}', space=vmem, size = 0x400, scoped, tag = 'output window, operand 0, single buffered']
    %12 = vsyncpa [#allocation4], 0
    %13 = vsyncpa [#allocation7], 0
    %14 = vsyncpa [#allocation5], 0
    // Predicated region
    $region2: #{tpu_custom_call.1} parent=1 // pred_check
      _
    $region3: #{tpu_custom_call.1} parent=1 // pred_check_branch
      %16 = sbr.rel (0) target = $region5
    $region4: #{tpu_custom_call.1} parent=1 // pred_region
      %s18 = ssub.s32 128, 128
      %19 = vsyncadd [#allocation4], %s18
      %s20 = sshll.u32 [#allocation3], 4
      %s21 = int_to_ptr.vmem [resolvable:$true] %s20
      %26 = dma.hbm_to_vmem [thread:$0]  %s0, 128, %s21, [#allocation4], 64, 64, 4
    $region5: #{tpu_custom_call.1} parent=1 // pred_fallthru
      _
    // Predicated region
    $region6: #{tpu_custom_call.1} parent=1 // pred_check
      _
    $region7: #{tpu_custom_call.1} parent=1 // pred_check_branch
      %28 = sbr.rel (0) target = $region9
    $region8: #{tpu_custom_call.1} parent=1 // pred_region
      %s30 = ssub.s32 256, 256
      %31 = vsyncadd [#allocation7], %s30
      %s32 = sshll.u32 [#allocation6], 4
      %s33 = int_to_ptr.vmem [resolvable:$true] %s32
      %38 = dma.hbm_to_vmem [thread:$0]  %s1, 256, %s33, [#allocation7], 64, 64, 4
    $region9: #{tpu_custom_call.1} parent=1 // pred_fallthru
      _
    // Predicated region
    $region10: #{tpu_custom_call.1} parent=1 // pred_check
      _
    $region11: #{tpu_custom_call.1} parent=1 // pred_check_branch
      %40 = sbr.rel (0) target = $region13
    $region12: #{tpu_custom_call.1} parent=1 // pred_region
      _
    $region13: #{tpu_custom_call.1} parent=1 // pred_fallthru
      _
    // Predicated region
    $region14: #{tpu_custom_call.1} parent=1 // pred_check
      _
    $region15: #{tpu_custom_call.1} parent=1 // pred_check_branch
      %42 = sbr.rel (0) target = $region17
    $region16: #{tpu_custom_call.1} parent=1 // pred_region
      _
    $region17: #{tpu_custom_call.1} parent=1 // pred_fallthru
      _
    // Predicated region
    $region18: #{tpu_custom_call.1} parent=1 // pred_check
      _
    $region19: #{tpu_custom_call.1} parent=1 // pred_check_branch
      %44 = sbr.rel (0) target = $region21
    $region20: #{tpu_custom_call.1} parent=1 // pred_region
      _
    $region21: #{tpu_custom_call.1} parent=1 // pred_fallthru
      _
    // Predicated region
    $region22: #{tpu_custom_call.1} parent=1 // pred_check
      _
    $region23: #{tpu_custom_call.1} parent=1 // pred_check_branch
      %46 = sbr.rel (0) target = $region25
    $region24: #{tpu_custom_call.1} parent=1 // pred_region
      %s48 = ssub.s32 512, 512
      %49 = vsyncadd [#allocation7], %s48
      %s50 = sshll.u32 [#allocation8], 4
      %s51 = int_to_ptr.vmem [resolvable:$true] %s50
      %56 = dma.hbm_to_vmem [thread:$0]  %s5, 512, %s51, [#allocation7], 64, 64, 4
    $region25: #{tpu_custom_call.1} parent=1 // pred_fallthru
      _
    // Predicated region
    $region26: #{tpu_custom_call.1} parent=1 // pred_check
      _
    $region27: #{tpu_custom_call.1} parent=1 // pred_check_branch
      %58 = sbr.rel (0) target = $region29
    $region28: #{tpu_custom_call.1} parent=1 // pred_region
      _
    $region29: #{tpu_custom_call.1} parent=1 // pred_fallthru
      _
    // Predicated region
    $region30: #{tpu_custom_call.1} parent=1 // pred_check
      _
    $region31: #{tpu_custom_call.1} parent=1 // pred_check_branch
      %60 = sbr.rel (0) target = $region33
    $region32: #{tpu_custom_call.1} parent=1 // pred_region
      %61 = dma.done [#allocation4], 128
    $region33: #{tpu_custom_call.1} parent=1 // pred_fallthru
      _
    // Predicated region
    $region34: #{tpu_custom_call.1} parent=1 // pred_check
      _
    $region35: #{tpu_custom_call.1} parent=1 // pred_check_branch
      %63 = sbr.rel (0) target = $region37
    $region36: #{tpu_custom_call.1} parent=1 // pred_region
      %64 = dma.done [#allocation7], 256
    $region37: #{tpu_custom_call.1} parent=1 // pred_fallthru
      _
    // Predicated region
    $region38: #{tpu_custom_call.1} parent=1 // pred_check
      _
    $region39: #{tpu_custom_call.1} parent=1 // pred_check_branch
      %66 = sbr.rel (0) target = $region41
    $region40: #{tpu_custom_call.1} parent=1 // pred_region
      %67 = dma.done [#allocation7], 512
    $region41: #{tpu_custom_call.1} parent=1 // pred_fallthru
      _
    %p69 = scmp.eq.s32.totalorder 0, 0
    // Predicated region
    $region42: #{tpu_custom_call.1} parent=1 // pred_check
      %p70 = pneg %p69
    $region43: #{tpu_custom_call.1} parent=1 // pred_check_branch
      %72 = sbr.rel (%p70) target = $region45
    $region44: #{tpu_custom_call.1} parent=1 // pred_region
      %vm73 = vcmask 254976
      %74 = vst.msk [vmem:[#allocation2] sm:$0x3] %vm73, 0.0
    $region45: #{tpu_custom_call.1} parent=1 // pred_fallthru
      _
    %v75 = vld [vmem:[#allocation3] sm:$0xf]
    %v76 = vld [vmem:[#allocation3 + $0x4] sm:$0xf]
    %v77 = vunpack.c.l.bf16 %v75
    %v78 = vunpack.c.l.bf16 %v76
    %v79 = vld [vmem:[#allocation2] sm:$0x3]
    %vm80 = vcmask 261120
    %v81 = vsel %vm80, %v77, 0.0
    %v82 = vrot.slane %v81, 4
    %v83 = vadd.f32 %v81, %v82
    %v84 = vrot.slane %v83, 2
    %v85 = vadd.f32 %v83, %v84
    %v86 = vrot.slane %v85, 1
    %v87 = vadd.f32 %v85, %v86
    %v88 = vsel %vm80, %v78, 0.0
    %v89 = vrot.slane %v88, 4
    %v90 = vadd.f32 %v88, %v89
    %v91 = vrot.slane %v90, 2
    %v92 = vadd.f32 %v90, %v91
    %v93 = vrot.slane %v92, 1
    %v94 = vadd.f32 %v92, %v93
    %vm97 = vcmask 1041409
    %v98 = vsel %vm97, %v94, %v87
    %v100 = vadd.f32 %v79, %v98
    %vm101 = vcmask 254976
    %102 = vst.msk [vmem:[#allocation2] sm:$0x3] %vm101, %v100
    // Predicated region
    $region46: #{tpu_custom_call.1} parent=1 // pred_check
      %p103 = pneg %p69
    $region47: #{tpu_custom_call.1} parent=1 // pred_check_branch
      %105 = sbr.rel (%p103) target = $region49
    $region48: #{tpu_custom_call.1} parent=1 // pred_region
      %v106 = vld [vmem:[#allocation2] sm:$0x3]
      %v107 = vmul.f32 %v106, 0.125
      %v108 = vpack.c.bf16 %v107, %v107
      %v109 = vld [vmem:[#allocation6] sm:$0xf]
      %v110 = vld [vmem:[#allocation6 + $0x4] sm:$0xf]
      %v111 = vld [vmem:[#allocation6 + $0x8] sm:$0xf]
      %v112 = vld [vmem:[#allocation6 + $0xc] sm:$0xf]
      %v113 = vld [vmem:[%s2] sm:$0x1]
      %v115 = vlaneseq
      %v116 = vshrl.u32 %v115, 7
      %v117 = vsub.s32 0, %v116
      %v118 = vrot.slane %v113, %v117
      %v124 = vunpack.c.l.b16 %v109
      %v125 = vunpack.c.l.b16 %v110
      %v126 = vunpack.c.l.b16 %v111
      %v127 = vunpack.c.l.b16 %v112
      %v128 = vpack.c.b16 %v125, %v124
      %v129 = vpack.c.b16 %v127, %v126
      %v133 = vsel %vm80, %v108, 0
      %135 = vmatprep.subr.bf16.mxu0 0
      %136 = vmatpush1.bf16.msra.mxu0 %v128
      %137 = vmatprep.subr.bf16.mxu0 0
      %138 = vmatpush1.bf16.msra.mxu0 %v129
      %139 = vmatprep.subr.bf16.mxu0 0
      %140 = vmatpush1.bf16.msra.mxu0 0
      %141 = vmatprep.subr.bf16.mxu0 0
      %142 = vmatpush1.bf16.msra.mxu0 0
      %143 = vmatprep.subr.bf16.mxu0 0
      %144 = vmatpush1.bf16.msra.mxu0 0
      %145 = vmatprep.subr.bf16.mxu0 0
      %146 = vmatpush1.bf16.msra.mxu0 0
      %147 = vmatprep.subr.bf16.mxu0 0
      %148 = vmatpush1.bf16.msra.mxu0 0
      %149 = vmatprep.subr.bf16.mxu0 0
      %150 = vmatpush1.bf16.msra.mxu0 0
      %151 = vmatprep.subr.bf16.mxu0 0
      %152 = vmatpush1.bf16.msra.mxu0 0
      %153 = vmatprep.subr.bf16.mxu0 0
      %154 = vmatpush1.bf16.msra.mxu0 0
      %155 = vmatprep.subr.bf16.mxu0 0
      %156 = vmatpush1.bf16.msra.mxu0 0
      %157 = vmatprep.subr.bf16.mxu0 0
      %158 = vmatpush1.bf16.msra.mxu0 0
      %159 = vmatprep.subr.bf16.mxu0 0
      %160 = vmatpush1.bf16.msra.mxu0 0
      %161 = vmatprep.subr.bf16.mxu0 0
      %162 = vmatpush1.bf16.msra.mxu0 0
      %163 = vmatprep.subr.bf16.mxu0 0
      %164 = vmatpush1.bf16.msra.mxu0 0
      %165 = vmatprep.subr.bf16.mxu0 0
      %166 = vmatpush1.bf16.msra.mxu0 0
      %167 = vmatprep.mubr.bf16.mxu0 0
      %168 = vmatmul.mubr.bf16.gmra.mrb[0].mxu0 %v133
      %v169 = vpop.f32.mrb[0].mxu0
      %v170 = vadd.f32 %v118, %v169
      %v171 = vpop.f32.mrb[0].mxu0
      %v172 = vpop.f32.mrb[0].mxu0
      %v173 = vpop.f32.mrb[0].mxu0
      %174 = vdwg.mxu0
      %vm175 = vcmask 517120
      %v176 = vsel %vm175, %v170, 0.0
      %177 = vadd.xlane.f32.xlu0 %v176
      %v178 = vpop.xlane.xlu0 %177
      %v179 = vrcp.pop 64.0
      %v180 = vmul.f32 %v178, %v179
      %v181 = vmul.f32 %v170, %v170
      %v182 = vsel %vm175, %v181, 0.0
      %183 = vadd.xlane.f32.xlu0 %v182
      %v184 = vpop.xlane.xlu0 %183
      %v185 = vmul.f32 %v184, %v179
      %v186 = vmul.f32 %v180, %v180
      %v187 = vsub.f32 %v185, %v186
      %v188 = vmax.f32 %v187, 0.0
      %v189 = vsub.f32 %v170, %v180
      %v190 = vadd.f32 %v188, 1e-05
      %v191 = vrsqrt.pop %v190
      %v192 = vmul.f32 %v189, %v191
      %v193 = vld [vmem:[%s3] sm:$0x1]
      %v195 = vlaneseq
      %v196 = vshrl.u32 %v195, 7
      %v197 = vsub.s32 0, %v196
      %v198 = vrot.slane %v193, %v197
      %v200 = vmul.f32 %v192, %v198
      %v201 = vld [vmem:[%s4] sm:$0x1]
      %v203 = vlaneseq
      %v204 = vshrl.u32 %v203, 7
      %v205 = vsub.s32 0, %v204
      %v206 = vrot.slane %v201, %v205
      %v208 = vadd.f32 %v200, %v206
      %v209 = vmul.f32 %v208, 0.5
      %v210 = vmul.f32 %v208, 0.70710677
      %v211 = verf.f32.pop %v210
      %v212 = vadd.f32 %v211, 1.0
      %v213 = vmul.f32 %v209, %v212
      %v214 = vpack.c.bf16 %v213, %v213
      %v215 = vld [vmem:[#allocation8] sm:$0xf]
      %v216 = vld [vmem:[#allocation8 + $0x4] sm:$0xf]
      %v217 = vld [vmem:[#allocation8 + $0x8] sm:$0xf]
      %v218 = vld [vmem:[#allocation8 + $0xc] sm:$0xf]
      %v219 = vld [vmem:[#allocation8 + $0x10] sm:$0xf]
      %v220 = vld [vmem:[#allocation8 + $0x14] sm:$0xf]
      %v221 = vld [vmem:[#allocation8 + $0x18] sm:$0xf]
      %v222 = vld [vmem:[#allocation8 + $0x1c] sm:$0xf]
      %v223 = vld [vmem:[%s6] sm:$0x1]
      %v225 = vlaneseq
      %v226 = vshrl.u32 %v225, 7
      %v227 = vsub.s32 0, %v226
      %v228 = vrot.slane %v223, %v227
      %v238 = vunpack.c.l.b16 %v215
      %v239 = vunpack.c.l.b16 %v216
      %v240 = vunpack.c.l.b16 %v217
      %v241 = vunpack.c.l.b16 %v218
      %v242 = vunpack.c.l.b16 %v219
      %v243 = vunpack.c.l.b16 %v220
      %v244 = vunpack.c.l.b16 %v221
      %v245 = vunpack.c.l.b16 %v222
      %v246 = vpack.c.b16 %v239, %v238
      %v247 = vpack.c.b16 %v241, %v240
      %v248 = vpack.c.b16 %v243, %v242
      %v249 = vpack.c.b16 %v245, %v244
      %vm254 = vcmask 523264
      %v256 = vsel %vm254, %v214, 0
      %258 = vmatprep.subr.bf16.mxu0 0
      %259 = vmatpush1.bf16.msra.mxu0 %v246
      %260 = vmatprep.subr.bf16.mxu0 0
      %261 = vmatpush1.bf16.msra.mxu0 %v247
      %262 = vmatprep.subr.bf16.mxu0 0
      %263 = vmatpush1.bf16.msra.mxu0 %v248
      %264 = vmatprep.subr.bf16.mxu0 0
      %265 = vmatpush1.bf16.msra.mxu0 %v249
      %266 = vmatprep.subr.bf16.mxu0 0
      %267 = vmatpush1.bf16.msra.mxu0 0
      %268 = vmatprep.subr.bf16.mxu0 0
      %269 = vmatpush1.bf16.msra.mxu0 0
      %270 = vmatprep.subr.bf16.mxu0 0
      %271 = vmatpush1.bf16.msra.mxu0 0
      %272 = vmatprep.subr.bf16.mxu0 0
      %273 = vmatpush1.bf16.msra.mxu0 0
      %274 = vmatprep.subr.bf16.mxu0 0
      %275 = vmatpush1.bf16.msra.mxu0 0
      %276 = vmatprep.subr.bf16.mxu0 0
      %277 = vmatpush1.bf16.msra.mxu0 0
      %278 = vmatprep.subr.bf16.mxu0 0
      %279 = vmatpush1.bf16.msra.mxu0 0
      %280 = vmatprep.subr.bf16.mxu0 0
      %281 = vmatpush1.bf16.msra.mxu0 0
      %282 = vmatprep.subr.bf16.mxu0 0
      %283 = vmatpush1.bf16.msra.mxu0 0
      %284 = vmatprep.subr.bf16.mxu0 0
      %285 = vmatpush1.bf16.msra.mxu0 0
      %286 = vmatprep.subr.bf16.mxu0 0
      %287 = vmatpush1.bf16.msra.mxu0 0
      %288 = vmatprep.subr.bf16.mxu0 0
      %289 = vmatpush1.bf16.msra.mxu0 0
      %290 = vmatprep.mubr.bf16.mxu0 0
      %291 = vmatmul.mubr.bf16.gmra.mrb[0].mxu0 %v256
      %v292 = vpop.f32.mrb[0].mxu0
      %v293 = vadd.f32 %v228, %v292
      %v294 = vpop.f32.mrb[0].mxu0
      %v295 = vpop.f32.mrb[0].mxu0
      %v296 = vpop.f32.mrb[0].mxu0
      %297 = vdwg.mxu0
      %298 = vst [vmem:[#allocation9] sm:$0x3] %v293
    $region49: #{tpu_custom_call.1} parent=1 // pred_fallthru
      _
    // Predicated region
    $region50: #{tpu_custom_call.1} parent=1 // pred_check
      _
    $region51: #{tpu_custom_call.1} parent=1 // pred_check_branch
      %300 = sbr.rel (0) target = $region53
    $region52: #{tpu_custom_call.1} parent=1 // pred_region
      %s302 = ssub.s32 32, 32
      %303 = vsyncadd [#allocation5], %s302
      %s305 = sshll.u32 [#allocation9], 4
      %s306 = int_to_ptr.vmem [resolvable:$true] %s305
      %308 = dma.vmem_to_hbm [thread:$0]  %s306, 32, %s7, [#allocation5]
    $region53: #{tpu_custom_call.1} parent=1 // pred_fallthru
      _
    // Predicated region
    $region54: #{tpu_custom_call.1} parent=1 // pred_check
      _
    $region55: #{tpu_custom_call.1} parent=1 // pred_check_branch
      %310 = sbr.rel (0) target = $region57
    $region56: #{tpu_custom_call.1} parent=1 // pred_region
      %311 = dma.done [#allocation5], 32
    $region57: #{tpu_custom_call.1} parent=1 // pred_fallthru
      _
    %312 = vsyncpa [#allocation4], 1
    %313 = vsyncpa [#allocation7], 1
    %314 = vsyncpa [#allocation5], 1

</llo_original>
